<compile_context>
chip_gen: v7x
topology: tpu7x:2x2x1
jax: 0.10.0
libtpu: 0.0.40
codegen_flags: <defaults>
</compile_context>

<pallas_src>
import jax
import jax.numpy as jnp
from jax.experimental import pallas as pl
from jax.experimental.pallas import tpu as pltpu


def _spectral_attn_kernel(x_ref, w1_ref, b1_ref, w2_ref, b2_ref, o_ref):
    # x_ref : (TB, C, H*W) block of TB batch elements (VMEM, lane-dense)
    # w1_ref: (C, HID)    b1_ref: (1, HID)
    # w2_ref: (HID, OC)   b2_ref: (1, OC)
    # o_ref : (TB, OC)
    x = x_ref[...].astype(jnp.float32)                     # (TB, C, HW)
    inv_hw = jnp.float32(1.0 / x.shape[-1])

    # Global spatial pooling: lane-axis reductions (VPU fold + XLU reduce).
    avg = jnp.sum(x, axis=-1) * inv_hw                     # (TB, C) true mean
    mx = jnp.max(x, axis=-1)                               # (TB, C)

    def shared_mlp(v):                                     # (TB, C) -> (TB, OC)
        h = jnp.dot(v, w1_ref[...], preferred_element_type=jnp.float32)
        h = jnp.maximum(h + b1_ref[...], 0.0)              # ReLU
        y = jnp.dot(h, w2_ref[...], preferred_element_type=jnp.float32)
        return jax.nn.sigmoid(y + b2_ref[...])             # Sigmoid in MLP

    out = jax.nn.sigmoid(shared_mlp(avg) + shared_mlp(mx))  # (TB, OC) final sigmoid
    o_ref[...] = out.astype(o_ref.dtype)


def _choose_batch_tile(n, c, hw, itemsize):
    """Pick TB: ~2 MiB X block per buffer, sublane-friendly, megacore aware."""
    blk = max(c * hw * itemsize, 1)
    target = 2 << 20                       # 2 MiB/buffer -> 2x-buffered ~= 4 MiB
    tb = max(1, min(n, target // blk))
    # Keep >= 2 grid steps when there is enough data to feed both v7x cores.
    if tb >= n and n >= 2 and n * blk >= (4 << 20):
        tb = -(-n // 2)                    # ceil(N/2)
    # Keep (TB, OC) output blocks sublane-friendly unless TB spans all of N.
    if tb < n and tb % 8:
        tb = min(n, -(-tb // 8) * 8)
    return tb


def spectral_attention(x, w1, b1, w2, b2):
    """Spectral_attention forward.

    x : (N, C, H, W) activations (f32 or bf16 -- read from HBM as-is).
    w1: (hidden, C)   torch-layout nn.Linear weight of the first MLP layer.
    b1: (hidden,)
    w2: (out, hidden) torch-layout nn.Linear weight of the second MLP layer.
    b2: (out,)
    Returns (N, out, 1, 1) float32.
    """
    N, C, H, W = x.shape
    HID, Cin = w1.shape
    OC, HID2 = w2.shape
    assert Cin == C and HID2 == HID and b1.shape == (HID,) and b2.shape == (OC,)
    HW = H * W

    # Free, lane-dense view of X (no host copy, no dtype change); tiny weights
    # are transposed / reshaped on the host (cheap, done once).
    x_flat = x.reshape(N, C, HW)
    w1_t = jnp.asarray(w1, jnp.float32).T.reshape(C, HID)    # (in, hidden)
    w2_t = jnp.asarray(w2, jnp.float32).T.reshape(HID, OC)   # (hidden, out)
    b1_r = jnp.asarray(b1, jnp.float32).reshape(1, HID)
    b2_r = jnp.asarray(b2, jnp.float32).reshape(1, OC)

    itemsize = x_flat.dtype.itemsize
    TB = _choose_batch_tile(N, C, HW, itemsize)
    grid = (pl.cdiv(N, TB),)

    # VMEM budget: double-buffered X block + output block + resident weights.
    x_block_bytes = TB * C * HW * itemsize
    weight_bytes = (w1_t.size + w2_t.size + b1_r.size + b2_r.size) * 4
    out_block_bytes = TB * OC * 4
    vmem_need = 2 * (x_block_bytes + out_block_bytes) + 2 * weight_bytes + (1 << 20)
    vmem_limit = int(min(max(vmem_need, 32 << 20), 64 << 20))

    bytes_accessed = (x_flat.size * itemsize + weight_bytes + N * OC * 4)
    flops = N * (2 * C * HW                 # mean + max reductions
                 + 2 * (2 * C * HID)        # first Linear (avg and max paths)
                 + 2 * (2 * HID * OC)       # second Linear
                 + 4 * HID + 5 * OC)        # bias / ReLU / add epilogue
    transcendentals = N * 3 * OC            # sigmoids

    out = pl.pallas_call(
        _spectral_attn_kernel,
        out_shape=jax.ShapeDtypeStruct((N, OC), jnp.float32),
        grid=grid,
        in_specs=[
            pl.BlockSpec((TB, C, HW), lambda n: (n, 0, 0)),  # X: TB batch elements
            pl.BlockSpec((C, HID), lambda n: (0, 0)),        # W1 (broadcast, VMEM-resident)
            pl.BlockSpec((1, HID), lambda n: (0, 0)),        # b1
            pl.BlockSpec((HID, OC), lambda n: (0, 0)),       # W2
            pl.BlockSpec((1, OC), lambda n: (0, 0)),         # b2
        ],
        out_specs=pl.BlockSpec((TB, OC), lambda n: (n, 0)),  # coalesced 2D output
        compiler_params=pltpu.CompilerParams(
            dimension_semantics=("parallel",),
            vmem_limit_bytes=vmem_limit),
        cost_estimate=pl.CostEstimate(
            flops=flops,
            transcendentals=transcendentals,
            bytes_accessed=bytes_accessed),
    )(x_flat, w1_t, b1_r, w2_t, b2_r)

    # Restore the module's (N, OC, 1, 1) output shape (free reshape).
    return out.reshape(N, OC, 1, 1)


def _reference(x, w1, b1, w2, b2):
    """Pure-JAX reference matching the PyTorch module (f32)."""
    N = x.shape[0]
    xf = x.astype(jnp.float32)
    avg = jnp.mean(xf, axis=(2, 3))
    mx = jnp.max(xf, axis=(2, 3))

    def mlp(v):
        h = jnp.maximum(v @ w1.T + b1, 0.0)
        return jax.nn.sigmoid(h @ w2.T + b2)

    y = jax.nn.sigmoid(mlp(avg) + mlp(mx))
    return y.reshape(N, -1, 1, 1)


if __name__ == "__main__":
    # Module config: in_features = C = 32, hidden_features = 16,
    # out_features = 32; activations (N, C, H, W) = (2, 32, 16, 16).
    N, C, H, W = 2, 32, 16, 16
    HID, OC = 16, 32

    key = jax.random.PRNGKey(0)
    kx, kw1, kb1, kw2, kb2 = jax.random.split(key, 5)
    x = jax.random.normal(kx, (N, C, H, W), dtype=jnp.float32)
    w1 = jax.random.normal(kw1, (HID, C), dtype=jnp.float32) * 0.1
    b1 = jax.random.normal(kb1, (HID,), dtype=jnp.float32) * 0.1
    w2 = jax.random.normal(kw2, (OC, HID), dtype=jnp.float32) * 0.1
    b2 = jax.random.normal(kb2, (OC,), dtype=jnp.float32) * 0.1

    ref = _reference(x, w1, b1, w2, b2)

    # f32 input path: must match the reference tightly.
    out = jax.block_until_ready(spectral_attention(x, w1, b1, w2, b2))
    assert out.shape == ref.shape, (out.shape, ref.shape)
    assert jnp.allclose(out, ref, atol=1e-5, rtol=1e-5), "f32 mismatch vs reference"

    # bf16 input path (halves the dominant HBM read; in-kernel f32 cast keeps
    # the pooling/MLP math in f32) -- looser tolerance vs. the f32 reference.
    out_bf16 = jax.block_until_ready(
        spectral_attention(x.astype(jnp.bfloat16), w1, b1, w2, b2))
    assert out_bf16.shape == ref.shape
    assert jnp.allclose(out_bf16, ref, atol=5e-2, rtol=5e-2), "bf16 mismatch vs reference"

    print("KERNEL_OK")
</pallas_src>

<mosaic_0001>
module attributes {stable_mosaic.version = 11 : i64} {
  func.func @_spectral_attn_kernel(%arg0: i32, %arg1: memref<2x32x256xf32, #tpu.memory_space<vmem>>, %arg2: memref<32x16xf32, #tpu.memory_space<vmem>>, %arg3: memref<1x16xf32, #tpu.memory_space<vmem>>, %arg4: memref<16x32xf32, #tpu.memory_space<vmem>>, %arg5: memref<1x32xf32, #tpu.memory_space<vmem>>, %arg6: memref<2x32xf32, #tpu.memory_space<vmem>>) attributes {dimension_semantics = [#tpu.dimension_semantics<parallel>], iteration_bounds = array<i64: 1>, scalar_prefetch = 0 : i64, scratch_operands = 0 : i64, tpu.core_type = #tpu.core_type<tc>, window_params = [{transform_indices = @transform_0, window_bounds = array<i64: 2, 32, 256>}, {pipeline_mode = #tpu.pipeline_mode<synchronous>, transform_indices = @transform_1, window_bounds = array<i64: 32, 16>}, {pipeline_mode = #tpu.pipeline_mode<synchronous>, transform_indices = @transform_2, window_bounds = array<i64: 1, 16>}, {pipeline_mode = #tpu.pipeline_mode<synchronous>, transform_indices = @transform_3, window_bounds = array<i64: 16, 32>}, {pipeline_mode = #tpu.pipeline_mode<synchronous>, transform_indices = @transform_4, window_bounds = array<i64: 1, 32>}, {transform_indices = @transform_5, window_bounds = array<i64: 2, 32>}]} {
    %c0 = arith.constant 0 : index
    %c0_0 = arith.constant 0 : index
    %c0_1 = arith.constant 0 : index
    %0 = vector.load %arg1[%c0, %c0_0, %c0_1] : memref<2x32x256xf32, #tpu.memory_space<vmem>>, vector<2x32x256xf32>
    %cst = arith.constant dense<0.000000e+00> : vector<2x32xf32>
    %1 = vector.multi_reduction <add>, %0, %cst [2] : vector<2x32x256xf32> to vector<2x32xf32>
    %cst_2 = arith.constant 3.906250e-03 : f32
    %2 = vector.broadcast %cst_2 : f32 to vector<2x32xf32>
    %3 = arith.mulf %1, %2 : vector<2x32xf32>
    %cst_3 = arith.constant dense<0xFF800000> : vector<2x32xf32>
    %4 = vector.multi_reduction <maximumf>, %0, %cst_3 [2] : vector<2x32x256xf32> to vector<2x32xf32>
    %c0_4 = arith.constant 0 : index
    %c0_5 = arith.constant 0 : index
    %5 = vector.load %arg2[%c0_4, %c0_5] : memref<32x16xf32, #tpu.memory_space<vmem>>, vector<32x16xf32>
    %cst_6 = arith.constant dense<0.000000e+00> : vector<2x16xf32>
    %6 = tpu.matmul %3, %5, %cst_6 {dimension_numbers = #tpu.dot_dimension_numbers<[1], [0], [0], [1], [0, 0, 1, 1], [], []>} : vector<2x32xf32>, vector<32x16xf32>, vector<2x16xf32> -> vector<2x16xf32>
    %c0_7 = arith.constant 0 : index
    %c0_8 = arith.constant 0 : index
    %7 = vector.load %arg3[%c0_7, %c0_8] : memref<1x16xf32, #tpu.memory_space<vmem>>, vector<1x16xf32>
    %8 = vector.broadcast %7 : vector<1x16xf32> to vector<2x16xf32>
    %9 = arith.addf %6, %8 : vector<2x16xf32>
    %cst_9 = arith.constant 0.000000e+00 : f32
    %10 = vector.broadcast %cst_9 : f32 to vector<2x16xf32>
    %11 = arith.maximumf %9, %10 : vector<2x16xf32>
    %c0_10 = arith.constant 0 : index
    %c0_11 = arith.constant 0 : index
    %12 = vector.load %arg4[%c0_10, %c0_11] : memref<16x32xf32, #tpu.memory_space<vmem>>, vector<16x32xf32>
    %cst_12 = arith.constant dense<0.000000e+00> : vector<2x32xf32>
    %13 = tpu.matmul %11, %12, %cst_12 {dimension_numbers = #tpu.dot_dimension_numbers<[1], [0], [0], [1], [0, 0, 1, 1], [], []>} : vector<2x16xf32>, vector<16x32xf32>, vector<2x32xf32> -> vector<2x32xf32>
    %c0_13 = arith.constant 0 : index
    %c0_14 = arith.constant 0 : index
    %14 = vector.load %arg5[%c0_13, %c0_14] : memref<1x32xf32, #tpu.memory_space<vmem>>, vector<1x32xf32>
    %15 = vector.broadcast %14 : vector<1x32xf32> to vector<2x32xf32>
    %16 = arith.addf %13, %15 : vector<2x32xf32>
    %17 = arith.negf %16 : vector<2x32xf32>
    %18 = math.exp %17 : vector<2x32xf32>
    %cst_15 = arith.constant 1.000000e+00 : f32
    %19 = vector.broadcast %cst_15 : f32 to vector<2x32xf32>
    %20 = arith.addf %19, %18 : vector<2x32xf32>
    %21 = arith.divf %19, %20 : vector<2x32xf32>
    %c0_16 = arith.constant 0 : index
    %c0_17 = arith.constant 0 : index
    %22 = vector.load %arg2[%c0_16, %c0_17] : memref<32x16xf32, #tpu.memory_space<vmem>>, vector<32x16xf32>
    %cst_18 = arith.constant dense<0.000000e+00> : vector<2x16xf32>
    %23 = tpu.matmul %4, %22, %cst_18 {dimension_numbers = #tpu.dot_dimension_numbers<[1], [0], [0], [1], [0, 0, 1, 1], [], []>} : vector<2x32xf32>, vector<32x16xf32>, vector<2x16xf32> -> vector<2x16xf32>
    %c0_19 = arith.constant 0 : index
    %c0_20 = arith.constant 0 : index
    %24 = vector.load %arg3[%c0_19, %c0_20] : memref<1x16xf32, #tpu.memory_space<vmem>>, vector<1x16xf32>
    %25 = vector.broadcast %24 : vector<1x16xf32> to vector<2x16xf32>
    %26 = arith.addf %23, %25 : vector<2x16xf32>
    %cst_21 = arith.constant 0.000000e+00 : f32
    %27 = vector.broadcast %cst_21 : f32 to vector<2x16xf32>
    %28 = arith.maximumf %26, %27 : vector<2x16xf32>
    %c0_22 = arith.constant 0 : index
    %c0_23 = arith.constant 0 : index
    %29 = vector.load %arg4[%c0_22, %c0_23] : memref<16x32xf32, #tpu.memory_space<vmem>>, vector<16x32xf32>
    %cst_24 = arith.constant dense<0.000000e+00> : vector<2x32xf32>
    %30 = tpu.matmul %28, %29, %cst_24 {dimension_numbers = #tpu.dot_dimension_numbers<[1], [0], [0], [1], [0, 0, 1, 1], [], []>} : vector<2x16xf32>, vector<16x32xf32>, vector<2x32xf32> -> vector<2x32xf32>
    %c0_25 = arith.constant 0 : index
    %c0_26 = arith.constant 0 : index
    %31 = vector.load %arg5[%c0_25, %c0_26] : memref<1x32xf32, #tpu.memory_space<vmem>>, vector<1x32xf32>
    %32 = vector.broadcast %31 : vector<1x32xf32> to vector<2x32xf32>
    %33 = arith.addf %30, %32 : vector<2x32xf32>
    %34 = arith.negf %33 : vector<2x32xf32>
    %35 = math.exp %34 : vector<2x32xf32>
    %cst_27 = arith.constant 1.000000e+00 : f32
    %36 = vector.broadcast %cst_27 : f32 to vector<2x32xf32>
    %37 = arith.addf %36, %35 : vector<2x32xf32>
    %38 = arith.divf %36, %37 : vector<2x32xf32>
    %39 = arith.addf %21, %38 : vector<2x32xf32>
    %40 = arith.negf %39 : vector<2x32xf32>
    %41 = math.exp %40 : vector<2x32xf32>
    %cst_28 = arith.constant 1.000000e+00 : f32
    %42 = vector.broadcast %cst_28 : f32 to vector<2x32xf32>
    %43 = arith.addf %42, %41 : vector<2x32xf32>
    %44 = arith.divf %42, %43 : vector<2x32xf32>
    %c0_29 = arith.constant 0 : index
    %c0_30 = arith.constant 0 : index
    %45 = vector.load %arg6[%c0_29, %c0_30] : memref<2x32xf32, #tpu.memory_space<vmem>>, vector<2x32xf32>
    tpu.vector_store %arg6[%c0_29, %c0_30], %44 {strides = array<i32>} : memref<2x32xf32, #tpu.memory_space<vmem>>, vector<2x32xf32>,
    return
  }
  func.func @transform_0(%arg0: i32) -> (i32, i32, i32) {
    %c0_i32 = arith.constant 0 : i32
    %c0_i32_0 = arith.constant 0 : i32
    %c0_i32_1 = arith.constant 0 : i32
    return %arg0, %c0_i32, %c0_i32_0 : i32, i32, i32
  }
  func.func @transform_1(%arg0: i32) -> (i32, i32) {
    %c0_i32 = arith.constant 0 : i32
    %c0_i32_0 = arith.constant 0 : i32
    %c0_i32_1 = arith.constant 0 : i32
    return %c0_i32, %c0_i32_0 : i32, i32
  }
  func.func @transform_2(%arg0: i32) -> (i32, i32) {
    %c0_i32 = arith.constant 0 : i32
    %c0_i32_0 = arith.constant 0 : i32
    %c0_i32_1 = arith.constant 0 : i32
    return %c0_i32, %c0_i32_0 : i32, i32
  }
  func.func @transform_3(%arg0: i32) -> (i32, i32) {
    %c0_i32 = arith.constant 0 : i32
    %c0_i32_0 = arith.constant 0 : i32
    %c0_i32_1 = arith.constant 0 : i32
    return %c0_i32, %c0_i32_0 : i32, i32
  }
  func.func @transform_4(%arg0: i32) -> (i32, i32) {
    %c0_i32 = arith.constant 0 : i32
    %c0_i32_0 = arith.constant 0 : i32
    %c0_i32_1 = arith.constant 0 : i32
    return %c0_i32, %c0_i32_0 : i32, i32
  }
  func.func @transform_5(%arg0: i32) -> (i32, i32) {
    %c0_i32 = arith.constant 0 : i32
    %c0_i32_0 = arith.constant 0 : i32
    return %arg0, %c0_i32 : i32, i32
  }
}

</mosaic_0001>

<llo_original>
// kernel: tpu_custom_call.1
$region0: #{tpu_custom_call.1}
  #allocation0 [shape = 'u32[]', space=smem, size = 0x4, offset = 0x4, fixed_abs, tag = 'smem constant byte address 0x4 - core index']
  #allocation1 [shape = 'u32[144,128]{1,0:T(1,128)}', space=vmem, size = 0x12000, scoped, tag = 'internal scratch']
  %s0 = inlined_call_operand.hbm [shape: f32[2,32,256], index: 0, kind: input, shape index: {}]
  %s1 = inlined_call_operand.vmem [shape: f32[32,16], index: 1, kind: input, shape index: {}]
  %s2 = inlined_call_operand.vmem [shape: f32[1,16], index: 2, kind: input, shape index: {}]
  %s3 = inlined_call_operand.vmem [shape: f32[16,32], index: 3, kind: input, shape index: {}]
  %s4 = inlined_call_operand.vmem [shape: f32[1,32], index: 4, kind: input, shape index: {}]
  %s5 = inlined_call_operand.hbm [shape: f32[2,32], index: 5, kind: output, shape index: {}]
  %s6 = sld [smem:[#allocation0]]
  $region34: #{tpu_custom_call.1} parent=0
    _
  %s8 = ssub.s32 1, %s6
  %s9 = scalar_select 0, %s8, %s6
  $region1: #{tpu_custom_call.1} parent=0
    #allocation2 [shape = 'u8[65536]{0}', space=vmem, size = 0x10000, scoped, tag = 'input window, operand 0, single buffered']
    #allocation3 [shape = 's32[1]{0}', space=sflag, size = 0x4, scoped, tag = 'scoped memory for tpu_custom_call.1']
    #allocation4 [shape = 's32[1]{0}', space=sflag, size = 0x4, scoped, tag = 'scoped memory for tpu_custom_call.1']
    #allocation5 [shape = 'u8[1024]{0}', space=vmem, size = 0x400, scoped, tag = 'output window, operand 0, single buffered']
    %10 = vsyncpa [#allocation3], 0
    %11 = vsyncpa [#allocation4], 0
    // Predicated region
    $region2: #{tpu_custom_call.1} parent=1 // pred_check
      _
    $region3: #{tpu_custom_call.1} parent=1 // pred_check_branch
      %13 = sbr.rel (0) target = $region5
    $region4: #{tpu_custom_call.1} parent=1 // pred_region
      %s15 = ssub.s32 2048, 2048
      %16 = vsyncadd [#allocation3], %s15
      %s17 = sshll.u32 [#allocation2], 4
      %s18 = int_to_ptr.vmem [resolvable:$true] %s17
      %23 = dma.hbm_to_vmem [thread:$0]  %s0, 2048, %s18, [#allocation3], 256, 256, 16
    $region5: #{tpu_custom_call.1} parent=1 // pred_fallthru
      _
    // Predicated region
    $region6: #{tpu_custom_call.1} parent=1 // pred_check
      _
    $region7: #{tpu_custom_call.1} parent=1 // pred_check_branch
      %25 = sbr.rel (0) target = $region9
    $region8: #{tpu_custom_call.1} parent=1 // pred_region
      _
    $region9: #{tpu_custom_call.1} parent=1 // pred_fallthru
      _
    // Predicated region
    $region10: #{tpu_custom_call.1} parent=1 // pred_check
      _
    $region11: #{tpu_custom_call.1} parent=1 // pred_check_branch
      %27 = sbr.rel (0) target = $region13
    $region12: #{tpu_custom_call.1} parent=1 // pred_region
      _
    $region13: #{tpu_custom_call.1} parent=1 // pred_fallthru
      _
    // Predicated region
    $region14: #{tpu_custom_call.1} parent=1 // pred_check
      _
    $region15: #{tpu_custom_call.1} parent=1 // pred_check_branch
      %29 = sbr.rel (0) target = $region17
    $region16: #{tpu_custom_call.1} parent=1 // pred_region
      _
    $region17: #{tpu_custom_call.1} parent=1 // pred_fallthru
      _
    // Predicated region
    $region18: #{tpu_custom_call.1} parent=1 // pred_check
      _
    $region19: #{tpu_custom_call.1} parent=1 // pred_check_branch
      %31 = sbr.rel (0) target = $region21
    $region20: #{tpu_custom_call.1} parent=1 // pred_region
      _
    $region21: #{tpu_custom_call.1} parent=1 // pred_fallthru
      _
    // Predicated region
    $region22: #{tpu_custom_call.1} parent=1 // pred_check
      _
    $region23: #{tpu_custom_call.1} parent=1 // pred_check_branch
      %33 = sbr.rel (0) target = $region25
    $region24: #{tpu_custom_call.1} parent=1 // pred_region
      %34 = dma.done [#allocation3], 2048
    $region25: #{tpu_custom_call.1} parent=1 // pred_fallthru
      _
    %v35 = vld [vmem:[#allocation2] sm:$0xff]
    %v36 = vld [vmem:[#allocation2 + $0x8] sm:$0xff]
    %v37 = vld [vmem:[#allocation2 + $0x10] sm:$0xff]
    %v38 = vld [vmem:[#allocation2 + $0x18] sm:$0xff]
    %v39 = vld [vmem:[#allocation2 + $0x20] sm:$0xff]
    %v40 = vld [vmem:[#allocation2 + $0x28] sm:$0xff]
    %v41 = vld [vmem:[#allocation2 + $0x30] sm:$0xff]
    %v42 = vld [vmem:[#allocation2 + $0x38] sm:$0xff]
    %v43 = vld [vmem:[#allocation2 + $0x40] sm:$0xff]
    %v44 = vld [vmem:[#allocation2 + $0x48] sm:$0xff]
    %v45 = vld [vmem:[#allocation2 + $0x50] sm:$0xff]
    %v46 = vld [vmem:[#allocation2 + $0x58] sm:$0xff]
    %v47 = vld [vmem:[#allocation2 + $0x60] sm:$0xff]
    %v48 = vld [vmem:[#allocation2 + $0x68] sm:$0xff]
    %v49 = vld [vmem:[#allocation2 + $0x70] sm:$0xff]
    %v50 = vld [vmem:[#allocation2 + $0x78] sm:$0xff]
    %v51 = vadd.f32 %v35, %v36
    %52 = vadd.xlane.f32.xlu0 %v51
    %v53 = vpop.xlane.xlu0 %52
    %v54 = vadd.f32 %v37, %v38
    %55 = vadd.xlane.f32.xlu0 %v54
    %v56 = vpop.xlane.xlu0 %55
    %v57 = vadd.f32 %v39, %v40
    %58 = vadd.xlane.f32.xlu0 %v57
    %v59 = vpop.xlane.xlu0 %58
    %v60 = vadd.f32 %v41, %v42
    %61 = vadd.xlane.f32.xlu0 %v60
    %v62 = vpop.xlane.xlu0 %61
    %v63 = vadd.f32 %v43, %v44
    %64 = vadd.xlane.f32.xlu0 %v63
    %v65 = vpop.xlane.xlu0 %64
    %v66 = vadd.f32 %v45, %v46
    %67 = vadd.xlane.f32.xlu0 %v66
    %v68 = vpop.xlane.xlu0 %67
    %v69 = vadd.f32 %v47, %v48
    %70 = vadd.xlane.f32.xlu0 %v69
    %v71 = vpop.xlane.xlu0 %70
    %v72 = vadd.f32 %v49, %v50
    %73 = vadd.xlane.f32.xlu0 %v72
    %v74 = vpop.xlane.xlu0 %73
    %v75 = vmul.f32 %v53, 0.00390625
    %v76 = vmul.f32 %v56, 0.00390625
    %v77 = vmul.f32 %v59, 0.00390625
    %v78 = vmul.f32 %v62, 0.00390625
    %v79 = vmul.f32 %v65, 0.00390625
    %v80 = vmul.f32 %v68, 0.00390625
    %v81 = vmul.f32 %v71, 0.00390625
    %v82 = vmul.f32 %v74, 0.00390625
    %v83 = vmax.f32 %v35, %v36
    %84 = vmax.xlane.f32.xlu0 %v83
    %v85 = vpop.xlane.xlu0 %84
    %v86 = vmax.f32 %v37, %v38
    %87 = vmax.xlane.f32.xlu0 %v86
    %v88 = vpop.xlane.xlu0 %87
    %v89 = vmax.f32 %v39, %v40
    %90 = vmax.xlane.f32.xlu0 %v89
    %v91 = vpop.xlane.xlu0 %90
    %v92 = vmax.f32 %v41, %v42
    %93 = vmax.xlane.f32.xlu0 %v92
    %v94 = vpop.xlane.xlu0 %93
    %v95 = vmax.f32 %v43, %v44
    %96 = vmax.xlane.f32.xlu0 %v95
    %v97 = vpop.xlane.xlu0 %96
    %v98 = vmax.f32 %v45, %v46
    %99 = vmax.xlane.f32.xlu0 %v98
    %v100 = vpop.xlane.xlu0 %99
    %v101 = vmax.f32 %v47, %v48
    %102 = vmax.xlane.f32.xlu0 %v101
    %v103 = vpop.xlane.xlu0 %102
    %v104 = vmax.f32 %v49, %v50
    %105 = vmax.xlane.f32.xlu0 %v104
    %v106 = vpop.xlane.xlu0 %105
    %v107 = vld [vmem:[%s1] sm:$0xff]
    %v108 = vld [vmem:[%s1 + $0x8] sm:$0xff]
    %v109 = vld [vmem:[%s1 + $0x10] sm:$0xff]
    %v110 = vld [vmem:[%s1 + $0x18] sm:$0xff]
    %v111 = vld [vmem:[%s2] sm:$0x1]
    %v113 = vlaneseq
    %v114 = vshrl.u32 %v113, 7
    %v115 = vsub.s32 0, %v114
    %v116 = vrot.slane %v111, %v115
    %v126 = vlaneseq
    %v127 = vand.u32 %v126, 127
    %v128 = vlaneseq
    %v129 = vshrl.u32 %v128, 7
    %v130 = vsub.s32 %v127, %v129
    %v131 = vrot.slane %v75, %v130
    %v132 = vadd.s32 %v127, 4294967288
    %v133 = vlaneseq
    %v134 = vshrl.u32 %v133, 7
    %v135 = vsub.s32 %v132, %v134
    %v136 = vrot.slane %v76, %v135
    %vm137 = vcmask 130112
    %v138 = vsel %vm137, %v136, %v131
    %v139 = vadd.s32 %v127, 4294967280
    %v140 = vlaneseq
    %v141 = vshrl.u32 %v140, 7
    %v142 = vsub.s32 %v139, %v141
    %v143 = vrot.slane %v77, %v142
    %vm144 = vcmask 195712
    %v145 = vsel %vm144, %v143, %v138
    %v146 = vadd.s32 %v127, 4294967272
    %v147 = vlaneseq
    %v148 = vshrl.u32 %v147, 7
    %v149 = vsub.s32 %v146, %v148
    %v150 = vrot.slane %v78, %v149
    %vm151 = vcmask 261312
    %v152 = vsel %vm151, %v150, %v145
    %v153 = vlaneseq
    %v154 = vshrl.u32 %v153, 7
    %v155 = vsub.s32 %v127, %v154
    %v156 = vrot.slane %v79, %v155
    %v157 = vlaneseq
    %v158 = vshrl.u32 %v157, 7
    %v159 = vsub.s32 %v132, %v158
    %v160 = vrot.slane %v80, %v159
    %v161 = vsel %vm137, %v160, %v156
    %v162 = vlaneseq
    %v163 = vshrl.u32 %v162, 7
    %v164 = vsub.s32 %v139, %v163
    %v165 = vrot.slane %v81, %v164
    %v166 = vsel %vm144, %v165, %v161
    %v167 = vlaneseq
    %v168 = vshrl.u32 %v167, 7
    %v169 = vsub.s32 %v146, %v168
    %v170 = vrot.slane %v82, %v169
    %v171 = vsel %vm151, %v170, %v166
    %vm172 = vcmask 1041409
    %v173 = vsel %vm172, %v171, %v152
    %vm174 = vcmask 261120
    %v175 = vsel %vm174, %v173, 0
    %177 = vmatprep.subr.mxu0 0.0
    %178 = vmatpush1.msra.mxu0 %v107
    %179 = vmatprep.subr.mxu0 0.0
    %180 = vmatpush1.msra.mxu0 %v108
    %181 = vmatprep.subr.mxu0 0.0
    %182 = vmatpush1.msra.mxu0 %v109
    %183 = vmatprep.subr.mxu0 0.0
    %184 = vmatpush1.msra.mxu0 %v110
    %185 = vmatprep.subr.mxu0 0.0
    %186 = vmatpush1.msra.mxu0 0.0
    %187 = vmatprep.subr.mxu0 0.0
    %188 = vmatpush1.msra.mxu0 0.0
    %189 = vmatprep.subr.mxu0 0.0
    %190 = vmatpush1.msra.mxu0 0.0
    %191 = vmatprep.subr.mxu0 0.0
    %192 = vmatpush1.msra.mxu0 0.0
    %193 = vmatprep.subr.mxu0 0.0
    %194 = vmatpush1.msra.mxu0 0.0
    %195 = vmatprep.subr.mxu0 0.0
    %196 = vmatpush1.msra.mxu0 0.0
    %197 = vmatprep.subr.mxu0 0.0
    %198 = vmatpush1.msra.mxu0 0.0
    %199 = vmatprep.subr.mxu0 0.0
    %200 = vmatpush1.msra.mxu0 0.0
    %201 = vmatprep.subr.mxu0 0.0
    %202 = vmatpush1.msra.mxu0 0.0
    %203 = vmatprep.subr.mxu0 0.0
    %204 = vmatpush1.msra.mxu0 0.0
    %205 = vmatprep.subr.mxu0 0.0
    %206 = vmatpush1.msra.mxu0 0.0
    %207 = vmatprep.subr.mxu0 0.0
    %208 = vmatpush1.msra.mxu0 0.0
    %209 = vmatprep.subr.mxu0 0.0
    %210 = vmatpush1.msra.mxu0 0.0
    %211 = vmatprep.subr.mxu0 0.0
    %212 = vmatpush1.msra.mxu0 0.0
    %213 = vmatprep.subr.mxu0 0.0
    %214 = vmatpush1.msra.mxu0 0.0
    %215 = vmatprep.subr.mxu0 0.0
    %216 = vmatpush1.msra.mxu0 0.0
    %217 = vmatprep.subr.mxu0 0.0
    %218 = vmatpush1.msra.mxu0 0.0
    %219 = vmatprep.subr.mxu0 0.0
    %220 = vmatpush1.msra.mxu0 0.0
    %221 = vmatprep.subr.mxu0 0.0
    %222 = vmatpush1.msra.mxu0 0.0
    %223 = vmatprep.subr.mxu0 0.0
    %224 = vmatpush1.msra.mxu0 0.0
    %225 = vmatprep.subr.mxu0 0.0
    %226 = vmatpush1.msra.mxu0 0.0
    %227 = vmatprep.subr.mxu0 0.0
    %228 = vmatpush1.msra.mxu0 0.0
    %229 = vmatprep.subr.mxu0 0.0
    %230 = vmatpush1.msra.mxu0 0.0
    %231 = vmatprep.subr.mxu0 0.0
    %232 = vmatpush1.msra.mxu0 0.0
    %233 = vmatprep.subr.mxu0 0.0
    %234 = vmatpush1.msra.mxu0 0.0
    %235 = vmatprep.subr.mxu0 0.0
    %236 = vmatpush1.msra.mxu0 0.0
    %237 = vmatprep.subr.mxu0 0.0
    %238 = vmatpush1.msra.mxu0 0.0
    %239 = vmatprep.subr.mxu0 0.0
    %240 = vmatpush1.msra.mxu0 0.0
    %241 = vmatprep.mubr.f32.mxu0 0.0
    %242 = vmatmul.mubr.f32.gmra.mrb[0].mxu0 %v175
    %v243 = vpop.f32.mrb[0].mxu0
    %v244 = vadd.f32 %v116, %v243
    %v245 = vpop.f32.mrb[0].mxu0
    %246 = vdwg.mxu0
    %v247 = vmax.f32 %v244, 0.0
    %v248 = vld [vmem:[%s3] sm:$0xff]
    %v249 = vld [vmem:[%s3 + $0x8] sm:$0xff]
    %v250 = vld [vmem:[%s4] sm:$0x1]
    %v252 = vlaneseq
    %v253 = vshrl.u32 %v252, 7
    %v254 = vsub.s32 0, %v253
    %v255 = vrot.slane %v250, %v254
    %vm257 = vcmask 130048
    %v259 = vsel %vm257, %v247, 0
    %261 = vmatprep.subr.mxu0 0.0
    %262 = vmatpush1.msra.mxu0 %v248
    %263 = vmatprep.subr.mxu0 0.0
    %264 = vmatpush1.msra.mxu0 %v249
    %265 = vmatprep.subr.mxu0 0.0
    %266 = vmatpush1.msra.mxu0 0.0
    %267 = vmatprep.subr.mxu0 0.0
    %268 = vmatpush1.msra.mxu0 0.0
    %269 = vmatprep.subr.mxu0 0.0
    %270 = vmatpush1.msra.mxu0 0.0
    %271 = vmatprep.subr.mxu0 0.0
    %272 = vmatpush1.msra.mxu0 0.0
    %273 = vmatprep.subr.mxu0 0.0
    %274 = vmatpush1.msra.mxu0 0.0
    %275 = vmatprep.subr.mxu0 0.0
    %276 = vmatpush1.msra.mxu0 0.0
    %277 = vmatprep.subr.mxu0 0.0
    %278 = vmatpush1.msra.mxu0 0.0
    %279 = vmatprep.subr.mxu0 0.0
    %280 = vmatpush1.msra.mxu0 0.0
    %281 = vmatprep.subr.mxu0 0.0
    %282 = vmatpush1.msra.mxu0 0.0
    %283 = vmatprep.subr.mxu0 0.0
    %284 = vmatpush1.msra.mxu0 0.0
    %285 = vmatprep.subr.mxu0 0.0
    %286 = vmatpush1.msra.mxu0 0.0
    %287 = vmatprep.subr.mxu0 0.0
    %288 = vmatpush1.msra.mxu0 0.0
    %289 = vmatprep.subr.mxu0 0.0
    %290 = vmatpush1.msra.mxu0 0.0
    %291 = vmatprep.subr.mxu0 0.0
    %292 = vmatpush1.msra.mxu0 0.0
    %293 = vmatprep.subr.mxu0 0.0
    %294 = vmatpush1.msra.mxu0 0.0
    %295 = vmatprep.subr.mxu0 0.0
    %296 = vmatpush1.msra.mxu0 0.0
    %297 = vmatprep.subr.mxu0 0.0
    %298 = vmatpush1.msra.mxu0 0.0
    %299 = vmatprep.subr.mxu0 0.0
    %300 = vmatpush1.msra.mxu0 0.0
    %301 = vmatprep.subr.mxu0 0.0
    %302 = vmatpush1.msra.mxu0 0.0
    %303 = vmatprep.subr.mxu0 0.0
    %304 = vmatpush1.msra.mxu0 0.0
    %305 = vmatprep.subr.mxu0 0.0
    %306 = vmatpush1.msra.mxu0 0.0
    %307 = vmatprep.subr.mxu0 0.0
    %308 = vmatpush1.msra.mxu0 0.0
    %309 = vmatprep.subr.mxu0 0.0
    %310 = vmatpush1.msra.mxu0 0.0
    %311 = vmatprep.subr.mxu0 0.0
    %312 = vmatpush1.msra.mxu0 0.0
    %313 = vmatprep.subr.mxu0 0.0
    %314 = vmatpush1.msra.mxu0 0.0
    %315 = vmatprep.subr.mxu0 0.0
    %316 = vmatpush1.msra.mxu0 0.0
    %317 = vmatprep.subr.mxu0 0.0
    %318 = vmatpush1.msra.mxu0 0.0
    %319 = vmatprep.subr.mxu0 0.0
    %320 = vmatpush1.msra.mxu0 0.0
    %321 = vmatprep.subr.mxu0 0.0
    %322 = vmatpush1.msra.mxu0 0.0
    %323 = vmatprep.subr.mxu0 0.0
    %324 = vmatpush1.msra.mxu0 0.0
    %325 = vmatprep.mubr.f32.mxu0 0.0
    %326 = vmatmul.mubr.f32.gmra.mrb[0].mxu0 %v259
    %v327 = vpop.f32.mrb[0].mxu0
    %v328 = vadd.f32 %v255, %v327
    %v329 = vpop.f32.mrb[0].mxu0
    %330 = vdwg.mxu0
    %v331 = vxor.u32 %v328, 2147483648
    %v332 = vmul.f32 %v331, 1.442695
    %v333 = vpow.pop %v332
    %v334 = vadd.f32 %v333, 1.0
    %v335 = vrcp.pop %v334
    %v336 = vmul.f32 1.0, %v335
    %v345 = vlaneseq
    %v346 = vshrl.u32 %v345, 7
    %v347 = vsub.s32 %v127, %v346
    %v348 = vrot.slane %v85, %v347
    %v349 = vlaneseq
    %v350 = vshrl.u32 %v349, 7
    %v351 = vsub.s32 %v132, %v350
    %v352 = vrot.slane %v88, %v351
    %v353 = vsel %vm137, %v352, %v348
    %v354 = vlaneseq
    %v355 = vshrl.u32 %v354, 7
    %v356 = vsub.s32 %v139, %v355
    %v357 = vrot.slane %v91, %v356
    %v358 = vsel %vm144, %v357, %v353
    %v359 = vlaneseq
    %v360 = vshrl.u32 %v359, 7
    %v361 = vsub.s32 %v146, %v360
    %v362 = vrot.slane %v94, %v361
    %v363 = vsel %vm151, %v362, %v358
    %v364 = vlaneseq
    %v365 = vshrl.u32 %v364, 7
    %v366 = vsub.s32 %v127, %v365
    %v367 = vrot.slane %v97, %v366
    %v368 = vlaneseq
    %v369 = vshrl.u32 %v368, 7
    %v370 = vsub.s32 %v132, %v369
    %v371 = vrot.slane %v100, %v370
    %v372 = vsel %vm137, %v371, %v367
    %v373 = vlaneseq
    %v374 = vshrl.u32 %v373, 7
    %v375 = vsub.s32 %v139, %v374
    %v376 = vrot.slane %v103, %v375
    %v377 = vsel %vm144, %v376, %v372
    %v378 = vlaneseq
    %v379 = vshrl.u32 %v378, 7
    %v380 = vsub.s32 %v146, %v379
    %v381 = vrot.slane %v106, %v380
    %v382 = vsel %vm151, %v381, %v377
    %v383 = vsel %vm172, %v382, %v363
    %v384 = vsel %vm174, %v383, 0
    %386 = vmatprep.subr.mxu0 0.0
    %387 = vmatpush1.msra.mxu0 %v107
    %388 = vmatprep.subr.mxu0 0.0
    %389 = vmatpush1.msra.mxu0 %v108
    %390 = vmatprep.subr.mxu0 0.0
    %391 = vmatpush1.msra.mxu0 %v109
    %392 = vmatprep.subr.mxu0 0.0
    %393 = vmatpush1.msra.mxu0 %v110
    %394 = vmatprep.subr.mxu0 0.0
    %395 = vmatpush1.msra.mxu0 0.0
    %396 = vmatprep.subr.mxu0 0.0
    %397 = vmatpush1.msra.mxu0 0.0
    %398 = vmatprep.subr.mxu0 0.0
    %399 = vmatpush1.msra.mxu0 0.0
    %400 = vmatprep.subr.mxu0 0.0
    %401 = vmatpush1.msra.mxu0 0.0
    %402 = vmatprep.subr.mxu0 0.0
    %403 = vmatpush1.msra.mxu0 0.0
    %404 = vmatprep.subr.mxu0 0.0
    %405 = vmatpush1.msra.mxu0 0.0
    %406 = vmatprep.subr.mxu0 0.0
    %407 = vmatpush1.msra.mxu0 0.0
    %408 = vmatprep.subr.mxu0 0.0
    %409 = vmatpush1.msra.mxu0 0.0
    %410 = vmatprep.subr.mxu0 0.0
    %411 = vmatpush1.msra.mxu0 0.0
    %412 = vmatprep.subr.mxu0 0.0
    %413 = vmatpush1.msra.mxu0 0.0
    %414 = vmatprep.subr.mxu0 0.0
    %415 = vmatpush1.msra.mxu0 0.0
    %416 = vmatprep.subr.mxu0 0.0
    %417 = vmatpush1.msra.mxu0 0.0
    %418 = vmatprep.subr.mxu0 0.0
    %419 = vmatpush1.msra.mxu0 0.0
    %420 = vmatprep.subr.mxu0 0.0
    %421 = vmatpush1.msra.mxu0 0.0
    %422 = vmatprep.subr.mxu0 0.0
    %423 = vmatpush1.msra.mxu0 0.0
    %424 = vmatprep.subr.mxu0 0.0
    %425 = vmatpush1.msra.mxu0 0.0
    %426 = vmatprep.subr.mxu0 0.0
    %427 = vmatpush1.msra.mxu0 0.0
    %428 = vmatprep.subr.mxu0 0.0
    %429 = vmatpush1.msra.mxu0 0.0
    %430 = vmatprep.subr.mxu0 0.0
    %431 = vmatpush1.msra.mxu0 0.0
    %432 = vmatprep.subr.mxu0 0.0
    %433 = vmatpush1.msra.mxu0 0.0
    %434 = vmatprep.subr.mxu0 0.0
    %435 = vmatpush1.msra.mxu0 0.0
    %436 = vmatprep.subr.mxu0 0.0
    %437 = vmatpush1.msra.mxu0 0.0
    %438 = vmatprep.subr.mxu0 0.0
    %439 = vmatpush1.msra.mxu0 0.0
    %440 = vmatprep.subr.mxu0 0.0
    %441 = vmatpush1.msra.mxu0 0.0
    %442 = vmatprep.subr.mxu0 0.0
    %443 = vmatpush1.msra.mxu0 0.0
    %444 = vmatprep.subr.mxu0 0.0
    %445 = vmatpush1.msra.mxu0 0.0
    %446 = vmatprep.subr.mxu0 0.0
    %447 = vmatpush1.msra.mxu0 0.0
    %448 = vmatprep.subr.mxu0 0.0
    %449 = vmatpush1.msra.mxu0 0.0
    %450 = vmatprep.mubr.f32.mxu0 0.0
    %451 = vmatmul.mubr.f32.gmra.mrb[0].mxu0 %v384
    %v452 = vpop.f32.mrb[0].mxu0
    %v453 = vadd.f32 %v116, %v452
    %v454 = vpop.f32.mrb[0].mxu0
    %455 = vdwg.mxu0
    %v456 = vmax.f32 %v453, 0.0
    %v458 = vsel %vm257, %v456, 0
    %460 = vmatprep.subr.mxu0 0.0
    %461 = vmatpush1.msra.mxu0 %v248
    %462 = vmatprep.subr.mxu0 0.0
    %463 = vmatpush1.msra.mxu0 %v249
    %464 = vmatprep.subr.mxu0 0.0
    %465 = vmatpush1.msra.mxu0 0.0
    %466 = vmatprep.subr.mxu0 0.0
    %467 = vmatpush1.msra.mxu0 0.0
    %468 = vmatprep.subr.mxu0 0.0
    %469 = vmatpush1.msra.mxu0 0.0
    %470 = vmatprep.subr.mxu0 0.0
    %471 = vmatpush1.msra.mxu0 0.0
    %472 = vmatprep.subr.mxu0 0.0
    %473 = vmatpush1.msra.mxu0 0.0
    %474 = vmatprep.subr.mxu0 0.0
    %475 = vmatpush1.msra.mxu0 0.0
    %476 = vmatprep.subr.mxu0 0.0
    %477 = vmatpush1.msra.mxu0 0.0
    %478 = vmatprep.subr.mxu0 0.0
    %479 = vmatpush1.msra.mxu0 0.0
    %480 = vmatprep.subr.mxu0 0.0
    %481 = vmatpush1.msra.mxu0 0.0
    %482 = vmatprep.subr.mxu0 0.0
    %483 = vmatpush1.msra.mxu0 0.0
    %484 = vmatprep.subr.mxu0 0.0
    %485 = vmatpush1.msra.mxu0 0.0
    %486 = vmatprep.subr.mxu0 0.0
    %487 = vmatpush1.msra.mxu0 0.0
    %488 = vmatprep.subr.mxu0 0.0
    %489 = vmatpush1.msra.mxu0 0.0
    %490 = vmatprep.subr.mxu0 0.0
    %491 = vmatpush1.msra.mxu0 0.0
    %492 = vmatprep.subr.mxu0 0.0
    %493 = vmatpush1.msra.mxu0 0.0
    %494 = vmatprep.subr.mxu0 0.0
    %495 = vmatpush1.msra.mxu0 0.0
    %496 = vmatprep.subr.mxu0 0.0
    %497 = vmatpush1.msra.mxu0 0.0
    %498 = vmatprep.subr.mxu0 0.0
    %499 = vmatpush1.msra.mxu0 0.0
    %500 = vmatprep.subr.mxu0 0.0
    %501 = vmatpush1.msra.mxu0 0.0
    %502 = vmatprep.subr.mxu0 0.0
    %503 = vmatpush1.msra.mxu0 0.0
    %504 = vmatprep.subr.mxu0 0.0
    %505 = vmatpush1.msra.mxu0 0.0
    %506 = vmatprep.subr.mxu0 0.0
    %507 = vmatpush1.msra.mxu0 0.0
    %508 = vmatprep.subr.mxu0 0.0
    %509 = vmatpush1.msra.mxu0 0.0
    %510 = vmatprep.subr.mxu0 0.0
    %511 = vmatpush1.msra.mxu0 0.0
    %512 = vmatprep.subr.mxu0 0.0
    %513 = vmatpush1.msra.mxu0 0.0
    %514 = vmatprep.subr.mxu0 0.0
    %515 = vmatpush1.msra.mxu0 0.0
    %516 = vmatprep.subr.mxu0 0.0
    %517 = vmatpush1.msra.mxu0 0.0
    %518 = vmatprep.subr.mxu0 0.0
    %519 = vmatpush1.msra.mxu0 0.0
    %520 = vmatprep.subr.mxu0 0.0
    %521 = vmatpush1.msra.mxu0 0.0
    %522 = vmatprep.subr.mxu0 0.0
    %523 = vmatpush1.msra.mxu0 0.0
    %524 = vmatprep.mubr.f32.mxu0 0.0
    %525 = vmatmul.mubr.f32.gmra.mrb[0].mxu0 %v458
    %v526 = vpop.f32.mrb[0].mxu0
    %v527 = vadd.f32 %v255, %v526
    %v528 = vpop.f32.mrb[0].mxu0
    %529 = vdwg.mxu0
    %v530 = vxor.u32 %v527, 2147483648
    %v531 = vmul.f32 %v530, 1.442695
    %v532 = vpow.pop %v531
    %v533 = vadd.f32 %v532, 1.0
    %v534 = vrcp.pop %v533
    %v535 = vmul.f32 1.0, %v534
    %v536 = vadd.f32 %v336, %v535
    %v537 = vxor.u32 %v536, 2147483648
    %v538 = vmul.f32 %v537, 1.442695
    %v539 = vpow.pop %v538
    %v540 = vadd.f32 %v539, 1.0
    %v541 = vrcp.pop %v540
    %v542 = vmul.f32 1.0, %v541
    %vm543 = vcmask 254976
    %544 = vst.msk [vmem:[#allocation5] sm:$0x3] %vm543, %v542
    // Predicated region
    $region26: #{tpu_custom_call.1} parent=1 // pred_check
      _
    $region27: #{tpu_custom_call.1} parent=1 // pred_check_branch
      %546 = sbr.rel (0) target = $region29
    $region28: #{tpu_custom_call.1} parent=1 // pred_region
      %s548 = ssub.s32 32, 32
      %549 = vsyncadd [#allocation4], %s548
      %s551 = sshll.u32 [#allocation5], 4
      %s552 = int_to_ptr.vmem [resolvable:$true] %s551
      %554 = dma.vmem_to_hbm [thread:$0]  %s552, 32, %s5, [#allocation4]
    $region29: #{tpu_custom_call.1} parent=1 // pred_fallthru
      _
    // Predicated region
    $region30: #{tpu_custom_call.1} parent=1 // pred_check
      _
    $region31: #{tpu_custom_call.1} parent=1 // pred_check_branch
      %556 = sbr.rel (0) target = $region33
    $region32: #{tpu_custom_call.1} parent=1 // pred_region
      %557 = dma.done [#allocation4], 32
    $region33: #{tpu_custom_call.1} parent=1 // pred_fallthru
      _
    %558 = vsyncpa [#allocation3], 1
    %559 = vsyncpa [#allocation4], 1

</llo_original>
